<compile_context>
chip_gen: v5e
topology: v5e:2x2
jax: 0.10.0
libtpu: 0.0.40
codegen_flags: <defaults>
</compile_context>

<pallas_src>
import functools

import jax
import jax.numpy as jnp
from jax.experimental import pallas as pl
from jax.experimental.pallas import tpu as pltpu


def _round_up(x, m):
    return (x + m - 1) // m * m


def _local_aug_kernel(heads, d_k, fine_ref, coarse_ref, motif_ref,
                      wq_ref, wkv_ref, wo_ref, bo_ref, out_ref):
    f32 = jnp.float32
    bt, H = fine_ref.shape

    fine = fine_ref[...].astype(f32)
    coarse = coarse_ref[...].astype(f32)
    motif = motif_ref[...].astype(f32)
    wq = wq_ref[...].astype(f32)        # pre-scaled by 1/d_k on the host
    wkv = wkv_ref[...].astype(f32)      # [wk | wv], shape (H, 2H)
    wo = wo_ref[...].astype(f32)
    bo = bo_ref[...].astype(f32)        # (1, H)

    # Head-indicator masks built in-kernel (pure VPU iota/compare; no HBM inputs).
    # mask[i, h] = 1 iff lane i belongs to head h; mask_t is its transpose, built
    # directly (no XLU transpose).
    lane = jax.lax.broadcasted_iota(jnp.int32, (H, heads), 0)
    head = jax.lax.broadcasted_iota(jnp.int32, (H, heads), 1) * d_k
    mask = ((lane >= head) & (lane < head + d_k)).astype(f32)          # (H, heads)
    lane_t = jax.lax.broadcasted_iota(jnp.int32, (heads, H), 1)
    head_t = jax.lax.broadcasted_iota(jnp.int32, (heads, H), 0) * d_k
    mask_t = ((lane_t >= head_t) & (lane_t < head_t + d_k)).astype(f32)  # (heads, H)

    # --- Projections: two MXU calls instead of five. ---------------------------
    fc = jnp.concatenate([fine, coarse], axis=0)            # (2bt, H)
    kv = jnp.dot(fc, wkv, preferred_element_type=f32)       # (2bt, 2H) = [K | V]
    q = jnp.dot(motif, wq, preferred_element_type=f32)      # (bt, H), already /d_k

    k_all = kv[:, :H]                                       # rows: [k_fine ; k_coarse]
    v_all = kv[:, H:]                                       # rows: [v_fine ; v_coarse]

    # --- Per-head attention logits: one mask matmul for both keys. -------------
    q2 = jnp.concatenate([q, q], axis=0)                    # (2bt, H)
    s = jnp.dot(q2 * k_all, mask, preferred_element_type=f32)   # (2bt, heads)
    s_f = s[:bt]
    s_c = s[bt:]

    # --- 2-way softmax as a sigmoid: one exp on the EUP, one divide. -----------
    p_f = 1.0 / (1.0 + jnp.exp(s_c - s_f))                  # (bt, heads)
    p_c = 1.0 - p_f

    # --- Broadcast head weights to their lanes (one matmul) and mix values. ----
    p = jnp.concatenate([p_f, p_c], axis=0)                 # (2bt, heads)
    pv = jnp.dot(p, mask_t, preferred_element_type=f32) * v_all   # (2bt, H)
    attn = pv[:bt] + pv[bt:]                                # (bt, H)

    # --- Output projection (with bias); single full-tile store. ----------------
    out = jnp.dot(attn, wo, preferred_element_type=f32) + bo
    out_ref[...] = out.astype(out_ref.dtype)


def local_augmentation(fine, coarse, motif, wq, wk, wv, wo, bo, *, heads,
                       block_b=1024):
    B, H = fine.shape
    assert H % heads == 0, "hid_dim must be divisible by heads"
    d_k = H // heads
    block_b = max(8, _round_up(block_b, 8))

    # Host-side parameter prep: fold the 1/d_k logit scale into wq and fuse K/V
    # weights along the output axis.  (bf16 storage of these also works: the kernel
    # casts to f32 and accumulates in f32.)
    wq_s = wq.astype(jnp.float32) * jnp.float32(1.0 / d_k)
    wkv = jnp.concatenate([wk, wv], axis=1).astype(jnp.float32)       # (H, 2H)
    wo_f = wo.astype(jnp.float32)
    bo2 = bo.reshape(1, H).astype(jnp.float32)

    # Batch tiling: sublane-aligned tiles (multiple of 8); pad batch if needed.
    bt = min(block_b, _round_up(B, 8))
    pad = (-B) % bt
    if pad:
        def _pad(x):
            return jnp.concatenate([x, jnp.zeros((pad, H), x.dtype)], axis=0)
        fine, coarse, motif = _pad(fine), _pad(coarse), _pad(motif)
    Bp = B + pad
    grid = (Bp // bt,)

    act_spec = pl.BlockSpec((bt, H), lambda i: (i, 0))

    def resident(shape):
        # Constant index_map -> weight stays resident in VMEM across all grid steps.
        return pl.BlockSpec(shape, lambda i: (0, 0))

    flops = 11 * Bp * H * H + 8 * Bp * H * heads + 12 * Bp * H
    bytes_accessed = 4 * (4 * Bp * H + 4 * H * H + H)

    kernel = functools.partial(_local_aug_kernel, heads, d_k)
    out = pl.pallas_call(
        kernel,
        out_shape=jax.ShapeDtypeStruct((Bp, H), jnp.float32),
        grid=grid,
        in_specs=[act_spec, act_spec, act_spec,
                  resident((H, H)), resident((H, 2 * H)),
                  resident((H, H)), resident((1, H))],
        out_specs=pl.BlockSpec((bt, H), lambda i: (i, 0)),
        compiler_params=pltpu.CompilerParams(
            dimension_semantics=("parallel",),
            vmem_limit_bytes=32 * 1024 * 1024),
        cost_estimate=pl.CostEstimate(
            flops=int(flops),
            transcendentals=int(Bp * heads),
            bytes_accessed=int(bytes_accessed)),
    )(fine, coarse, motif, wq_s, wkv, wo_f, bo2)

    return out[:B] if pad else out


def local_augmentation_ref(fine, coarse, motif, wq, wk, wv, wo, bo, *, heads):
    """Pure-JAX transcription of the PyTorch forward for verification."""
    B, H = fine.shape
    d_k = H // heads
    Q = motif.reshape(B, 1, 1, H)
    K = jnp.stack([fine, coarse], axis=1).reshape(B, 1, 2, H)
    V = K
    q = (Q @ wq).reshape(B, 1, heads, d_k).transpose(0, 2, 1, 3)  # (B, heads, 1, d_k)
    k = (K @ wk).reshape(B, 2, heads, d_k).transpose(0, 2, 1, 3)  # (B, heads, 2, d_k)
    v = (V @ wv).reshape(B, 2, heads, d_k).transpose(0, 2, 1, 3)  # (B, heads, 2, d_k)
    s = (q @ jnp.swapaxes(k, -2, -1)) / d_k                       # (B, heads, 1, 2)
    p = jax.nn.softmax(s, axis=-1)
    o = (p @ v).transpose(0, 2, 1, 3).reshape(B, 1, H)
    o = o @ wo + bo.reshape(1, 1, H)
    return o[:, 0, :]


if __name__ == "__main__":
    batch, hid_dim, heads = 2, 32, 4

    key = jax.random.PRNGKey(0)
    (k_fine, k_coarse, k_motif, k_wq, k_wk, k_wv, k_wo, k_bo,
     k_f2, k_c2, k_m2) = jax.random.split(key, 11)

    fine = jax.random.normal(k_fine, (batch, hid_dim), dtype=jnp.float32)
    coarse = jax.random.normal(k_coarse, (batch, hid_dim), dtype=jnp.float32)
    motif = jax.random.normal(k_motif, (batch, hid_dim), dtype=jnp.float32)

    # Deterministic synthetic parameters (weights stored as (in, out); y = x @ W).
    scale = 1.0 / jnp.sqrt(jnp.float32(hid_dim))
    wq = jax.random.normal(k_wq, (hid_dim, hid_dim), dtype=jnp.float32) * scale
    wk = jax.random.normal(k_wk, (hid_dim, hid_dim), dtype=jnp.float32) * scale
    wv = jax.random.normal(k_wv, (hid_dim, hid_dim), dtype=jnp.float32) * scale
    wo = jax.random.normal(k_wo, (hid_dim, hid_dim), dtype=jnp.float32) * scale
    bo = jax.random.normal(k_bo, (hid_dim,), dtype=jnp.float32) * 0.1

    # Small-batch path (single padded tile).
    out = local_augmentation(fine, coarse, motif, wq, wk, wv, wo, bo, heads=heads)
    out = jax.block_until_ready(out)
    ref = local_augmentation_ref(fine, coarse, motif, wq, wk, wv, wo, bo, heads=heads)
    assert out.shape == (batch, hid_dim)
    assert jnp.allclose(out, ref, atol=1e-4, rtol=1e-4), "mismatch vs JAX reference"

    # Multi-tile path: exercises the batch grid, padding, and resident weights.
    batch2 = 18
    fine2 = jax.random.normal(k_f2, (batch2, hid_dim), dtype=jnp.float32)
    coarse2 = jax.random.normal(k_c2, (batch2, hid_dim), dtype=jnp.float32)
    motif2 = jax.random.normal(k_m2, (batch2, hid_dim), dtype=jnp.float32)
    out2 = local_augmentation(fine2, coarse2, motif2, wq, wk, wv, wo, bo,
                              heads=heads, block_b=8)
    out2 = jax.block_until_ready(out2)
    ref2 = local_augmentation_ref(fine2, coarse2, motif2, wq, wk, wv, wo, bo,
                                  heads=heads)
    assert out2.shape == (batch2, hid_dim)
    assert jnp.allclose(out2, ref2, atol=1e-4, rtol=1e-4), "mismatch (tiled) vs reference"

    print("KERNEL_OK")
</pallas_src>

<mosaic_0001>
module attributes {stable_mosaic.version = 11 : i64} {
  func.func @_local_aug_kernel(%arg0: i32, %arg1: memref<8x32xf32, #tpu.memory_space<vmem>>, %arg2: memref<8x32xf32, #tpu.memory_space<vmem>>, %arg3: memref<8x32xf32, #tpu.memory_space<vmem>>, %arg4: memref<32x32xf32, #tpu.memory_space<vmem>>, %arg5: memref<32x64xf32, #tpu.memory_space<vmem>>, %arg6: memref<32x32xf32, #tpu.memory_space<vmem>>, %arg7: memref<1x32xf32, #tpu.memory_space<vmem>>, %arg8: memref<8x32xf32, #tpu.memory_space<vmem>>) attributes {dimension_semantics = [#tpu.dimension_semantics<parallel>], iteration_bounds = array<i64: 1>, scalar_prefetch = 0 : i64, scratch_operands = 0 : i64, tpu.core_type = #tpu.core_type<tc>, window_params = [{transform_indices = @transform_0, window_bounds = array<i64: 8, 32>}, {transform_indices = @transform_1, window_bounds = array<i64: 8, 32>}, {transform_indices = @transform_2, window_bounds = array<i64: 8, 32>}, {pipeline_mode = #tpu.pipeline_mode<synchronous>, transform_indices = @transform_3, window_bounds = array<i64: 32, 32>}, {pipeline_mode = #tpu.pipeline_mode<synchronous>, transform_indices = @transform_4, window_bounds = array<i64: 32, 64>}, {pipeline_mode = #tpu.pipeline_mode<synchronous>, transform_indices = @transform_5, window_bounds = array<i64: 32, 32>}, {pipeline_mode = #tpu.pipeline_mode<synchronous>, transform_indices = @transform_6, window_bounds = array<i64: 1, 32>}, {transform_indices = @transform_7, window_bounds = array<i64: 8, 32>}]} {
    %c0 = arith.constant 0 : index
    %c0_0 = arith.constant 0 : index
    %0 = vector.load %arg1[%c0, %c0_0] : memref<8x32xf32, #tpu.memory_space<vmem>>, vector<8x32xf32>
    %c0_1 = arith.constant 0 : index
    %c0_2 = arith.constant 0 : index
    %1 = vector.load %arg2[%c0_1, %c0_2] : memref<8x32xf32, #tpu.memory_space<vmem>>, vector<8x32xf32>
    %c0_3 = arith.constant 0 : index
    %c0_4 = arith.constant 0 : index
    %2 = vector.load %arg3[%c0_3, %c0_4] : memref<8x32xf32, #tpu.memory_space<vmem>>, vector<8x32xf32>
    %c0_5 = arith.constant 0 : index
    %c0_6 = arith.constant 0 : index
    %3 = vector.load %arg4[%c0_5, %c0_6] : memref<32x32xf32, #tpu.memory_space<vmem>>, vector<32x32xf32>
    %c0_7 = arith.constant 0 : index
    %c0_8 = arith.constant 0 : index
    %4 = vector.load %arg5[%c0_7, %c0_8] : memref<32x64xf32, #tpu.memory_space<vmem>>, vector<32x64xf32>
    %c0_9 = arith.constant 0 : index
    %c0_10 = arith.constant 0 : index
    %5 = vector.load %arg6[%c0_9, %c0_10] : memref<32x32xf32, #tpu.memory_space<vmem>>, vector<32x32xf32>
    %c0_11 = arith.constant 0 : index
    %c0_12 = arith.constant 0 : index
    %6 = vector.load %arg7[%c0_11, %c0_12] : memref<1x32xf32, #tpu.memory_space<vmem>>, vector<1x32xf32>
    %7 = tpu.iota {dimensions = array<i32: 0>} : vector<32x4xi32>
    %8 = tpu.iota {dimensions = array<i32: 1>} : vector<32x4xi32>
    %c8_i32 = arith.constant 8 : i32
    %9 = vector.broadcast %c8_i32 : i32 to vector<32x4xi32>
    %10 = arith.muli %8, %9 : vector<32x4xi32>
    %11 = arith.cmpi sge, %7, %10 : vector<32x4xi32>
    %c8_i32_13 = arith.constant 8 : i32
    %12 = vector.broadcast %c8_i32_13 : i32 to vector<32x4xi32>
    %13 = arith.addi %10, %12 : vector<32x4xi32>
    %14 = arith.cmpi slt, %7, %13 : vector<32x4xi32>
    %15 = arith.andi %11, %14 : vector<32x4xi1>
    %16 = arith.extui %15 : vector<32x4xi1> to vector<32x4xi32>
    %17 = arith.sitofp %16 : vector<32x4xi32> to vector<32x4xf32>
    %18 = tpu.iota {dimensions = array<i32: 1>} : vector<4x32xi32>
    %19 = tpu.iota {dimensions = array<i32: 0>} : vector<4x32xi32>
    %c8_i32_14 = arith.constant 8 : i32
    %20 = vector.broadcast %c8_i32_14 : i32 to vector<4x32xi32>
    %21 = arith.muli %19, %20 : vector<4x32xi32>
    %22 = arith.cmpi sge, %18, %21 : vector<4x32xi32>
    %c8_i32_15 = arith.constant 8 : i32
    %23 = vector.broadcast %c8_i32_15 : i32 to vector<4x32xi32>
    %24 = arith.addi %21, %23 : vector<4x32xi32>
    %25 = arith.cmpi slt, %18, %24 : vector<4x32xi32>
    %26 = arith.andi %22, %25 : vector<4x32xi1>
    %27 = arith.extui %26 : vector<4x32xi1> to vector<4x32xi32>
    %28 = arith.sitofp %27 : vector<4x32xi32> to vector<4x32xf32>
    %29 = tpu.concatenate %0, %1 in 0 : vector<8x32xf32>, vector<8x32xf32> -> vector<16x32xf32>
    %cst = arith.constant dense<0.000000e+00> : vector<16x64xf32>
    %30 = tpu.matmul %29, %4, %cst {dimension_numbers = #tpu.dot_dimension_numbers<[1], [0], [0], [1], [0, 0, 1, 1], [], []>} : vector<16x32xf32>, vector<32x64xf32>, vector<16x64xf32> -> vector<16x64xf32>
    %cst_16 = arith.constant dense<0.000000e+00> : vector<8x32xf32>
    %31 = tpu.matmul %2, %3, %cst_16 {dimension_numbers = #tpu.dot_dimension_numbers<[1], [0], [0], [1], [0, 0, 1, 1], [], []>} : vector<8x32xf32>, vector<32x32xf32>, vector<8x32xf32> -> vector<8x32xf32>
    %32 = vector.extract_strided_slice %30 {offsets = [0, 0], sizes = [16, 32], strides = [1, 1]} : vector<16x64xf32> to vector<16x32xf32>
    %33 = vector.extract_strided_slice %30 {offsets = [0, 32], sizes = [16, 32], strides = [1, 1]} : vector<16x64xf32> to vector<16x32xf32>
    %34 = tpu.concatenate %31, %31 in 0 : vector<8x32xf32>, vector<8x32xf32> -> vector<16x32xf32>
    %35 = arith.mulf %34, %32 : vector<16x32xf32>
    %cst_17 = arith.constant dense<0.000000e+00> : vector<16x4xf32>
    %36 = tpu.matmul %35, %17, %cst_17 {dimension_numbers = #tpu.dot_dimension_numbers<[1], [0], [0], [1], [0, 0, 1, 1], [], []>} : vector<16x32xf32>, vector<32x4xf32>, vector<16x4xf32> -> vector<16x4xf32>
    %37 = vector.extract_strided_slice %36 {offsets = [0, 0], sizes = [8, 4], strides = [1, 1]} : vector<16x4xf32> to vector<8x4xf32>
    %38 = vector.extract_strided_slice %36 {offsets = [8, 0], sizes = [8, 4], strides = [1, 1]} : vector<16x4xf32> to vector<8x4xf32>
    %39 = arith.subf %38, %37 : vector<8x4xf32>
    %40 = math.exp %39 : vector<8x4xf32>
    %cst_18 = arith.constant 1.000000e+00 : f32
    %41 = vector.broadcast %cst_18 : f32 to vector<8x4xf32>
    %42 = arith.addf %41, %40 : vector<8x4xf32>
    %cst_19 = arith.constant 1.000000e+00 : f32
    %43 = vector.broadcast %cst_19 : f32 to vector<8x4xf32>
    %44 = arith.divf %43, %42 : vector<8x4xf32>
    %cst_20 = arith.constant 1.000000e+00 : f32
    %45 = vector.broadcast %cst_20 : f32 to vector<8x4xf32>
    %46 = arith.subf %45, %44 : vector<8x4xf32>
    %47 = tpu.concatenate %44, %46 in 0 : vector<8x4xf32>, vector<8x4xf32> -> vector<16x4xf32>
    %cst_21 = arith.constant dense<0.000000e+00> : vector<16x32xf32>
    %48 = tpu.matmul %47, %28, %cst_21 {dimension_numbers = #tpu.dot_dimension_numbers<[1], [0], [0], [1], [0, 0, 1, 1], [], []>} : vector<16x4xf32>, vector<4x32xf32>, vector<16x32xf32> -> vector<16x32xf32>
    %49 = arith.mulf %48, %33 : vector<16x32xf32>
    %50 = vector.extract_strided_slice %49 {offsets = [0, 0], sizes = [8, 32], strides = [1, 1]} : vector<16x32xf32> to vector<8x32xf32>
    %51 = vector.extract_strided_slice %49 {offsets = [8, 0], sizes = [8, 32], strides = [1, 1]} : vector<16x32xf32> to vector<8x32xf32>
    %52 = arith.addf %50, %51 : vector<8x32xf32>
    %cst_22 = arith.constant dense<0.000000e+00> : vector<8x32xf32>
    %53 = tpu.matmul %52, %5, %cst_22 {dimension_numbers = #tpu.dot_dimension_numbers<[1], [0], [0], [1], [0, 0, 1, 1], [], []>} : vector<8x32xf32>, vector<32x32xf32>, vector<8x32xf32> -> vector<8x32xf32>
    %54 = vector.broadcast %6 : vector<1x32xf32> to vector<8x32xf32>
    %55 = arith.addf %53, %54 : vector<8x32xf32>
    %c0_23 = arith.constant 0 : index
    %c0_24 = arith.constant 0 : index
    %56 = vector.load %arg8[%c0_23, %c0_24] : memref<8x32xf32, #tpu.memory_space<vmem>>, vector<8x32xf32>
    tpu.vector_store %arg8[%c0_23, %c0_24], %55 {strides = array<i32>} : memref<8x32xf32, #tpu.memory_space<vmem>>, vector<8x32xf32>,
    return
  }
  func.func @transform_0(%arg0: i32) -> (i32, i32) {
    %c0_i32 = arith.constant 0 : i32
    %c0_i32_0 = arith.constant 0 : i32
    return %arg0, %c0_i32 : i32, i32
  }
  func.func @transform_1(%arg0: i32) -> (i32, i32) {
    %c0_i32 = arith.constant 0 : i32
    %c0_i32_0 = arith.constant 0 : i32
    return %arg0, %c0_i32 : i32, i32
  }
  func.func @transform_2(%arg0: i32) -> (i32, i32) {
    %c0_i32 = arith.constant 0 : i32
    %c0_i32_0 = arith.constant 0 : i32
    return %arg0, %c0_i32 : i32, i32
  }
  func.func @transform_3(%arg0: i32) -> (i32, i32) {
    %c0_i32 = arith.constant 0 : i32
    %c0_i32_0 = arith.constant 0 : i32
    %c0_i32_1 = arith.constant 0 : i32
    return %c0_i32, %c0_i32_0 : i32, i32
  }
  func.func @transform_4(%arg0: i32) -> (i32, i32) {
    %c0_i32 = arith.constant 0 : i32
    %c0_i32_0 = arith.constant 0 : i32
    %c0_i32_1 = arith.constant 0 : i32
    return %c0_i32, %c0_i32_0 : i32, i32
  }
  func.func @transform_5(%arg0: i32) -> (i32, i32) {
    %c0_i32 = arith.constant 0 : i32
    %c0_i32_0 = arith.constant 0 : i32
    %c0_i32_1 = arith.constant 0 : i32
    return %c0_i32, %c0_i32_0 : i32, i32
  }
  func.func @transform_6(%arg0: i32) -> (i32, i32) {
    %c0_i32 = arith.constant 0 : i32
    %c0_i32_0 = arith.constant 0 : i32
    %c0_i32_1 = arith.constant 0 : i32
    return %c0_i32, %c0_i32_0 : i32, i32
  }
  func.func @transform_7(%arg0: i32) -> (i32, i32) {
    %c0_i32 = arith.constant 0 : i32
    %c0_i32_0 = arith.constant 0 : i32
    return %arg0, %c0_i32 : i32, i32
  }
}

</mosaic_0001>

<llo_original>
// kernel: tpu_custom_call.1
$region0: #{tpu_custom_call.1}
  #allocation0 [shape = 'u32[]', space=smem, size = 0x4, offset = 0x4, fixed_abs, tag = 'smem constant byte address 0x4 - core index']
  #allocation1 [shape = 'u32[72,128]{1,0:T(1,128)}', space=vmem, size = 0x9000, scoped, tag = 'internal scratch']
  %s0 = inlined_call_operand.hbm [shape: f32[8,32], index: 0, kind: input, shape index: {}]
  %s1 = inlined_call_operand.hbm [shape: f32[8,32], index: 1, kind: input, shape index: {}]
  %s2 = inlined_call_operand.hbm [shape: f32[8,32], index: 2, kind: input, shape index: {}]
  %s3 = inlined_call_operand.hbm [shape: f32[32,32], index: 3, kind: input, shape index: {}]
  %s4 = inlined_call_operand.hbm [shape: f32[32,64], index: 4, kind: input, shape index: {}]
  %s5 = inlined_call_operand.hbm [shape: f32[32,32], index: 5, kind: input, shape index: {}]
  %s6 = inlined_call_operand.vmem [shape: f32[1,32], index: 6, kind: input, shape index: {}]
  %s7 = inlined_call_operand.hbm [shape: f32[8,32], index: 7, kind: output, shape index: {}]
  %s8 = sld [smem:[#allocation0]]
  $region62: #{tpu_custom_call.1} parent=0
    _
  %s10 = ssub.s32 1, %s8
  %s11 = scalar_select 0, %s10, %s8
  $region1: #{tpu_custom_call.1} parent=0
    #allocation2 [shape = 'u8[4096]{0}', space=vmem, size = 0x1000, scoped, tag = 'input window, operand 0, single buffered']
    #allocation3 [shape = 's32[1]{0}', space=sflag, size = 0x4, scoped, tag = 'scoped memory for tpu_custom_call.1']
    #allocation4 [shape = 's32[1]{0}', space=sflag, size = 0x4, scoped, tag = 'scoped memory for tpu_custom_call.1']
    #allocation5 [shape = 'u8[4096]{0}', space=vmem, size = 0x1000, scoped, tag = 'input window, operand 1, single buffered']
    #allocation6 [shape = 's32[1]{0}', space=sflag, size = 0x4, scoped, tag = 'scoped memory for tpu_custom_call.1']
    #allocation7 [shape = 'u8[4096]{0}', space=vmem, size = 0x1000, scoped, tag = 'input window, operand 2, single buffered']
    #allocation8 [shape = 'u8[16384]{0}', space=vmem, size = 0x4000, scoped, tag = 'input window, operand 3, single buffered']
    #allocation9 [shape = 's32[1]{0}', space=sflag, size = 0x4, scoped, tag = 'scoped memory for tpu_custom_call.1']
    #allocation10 [shape = 'u8[16384]{0}', space=vmem, size = 0x4000, scoped, tag = 'input window, operand 4, single buffered']
    #allocation11 [shape = 'u8[16384]{0}', space=vmem, size = 0x4000, scoped, tag = 'input window, operand 5, single buffered']
    #allocation12 [shape = 's32[1]{0}', space=sflag, size = 0x4, scoped, tag = 'scoped memory for tpu_custom_call.1']
    #allocation13 [shape = 'u8[4096]{0}', space=vmem, size = 0x1000, scoped, tag = 'output window, operand 0, single buffered']
    %12 = vsyncpa [#allocation3], 0
    %13 = vsyncpa [#allocation6], 0
    %14 = vsyncpa [#allocation9], 0
    %15 = vsyncpa [#allocation12], 0
    %16 = vsyncpa [#allocation4], 0
    // Predicated region
    $region2: #{tpu_custom_call.1} parent=1 // pred_check
      _
    $region3: #{tpu_custom_call.1} parent=1 // pred_check_branch
      %18 = sbr.rel (0) target = $region5
    $region4: #{tpu_custom_call.1} parent=1 // pred_region
      %20 = vsyncadd [#allocation3], 0
      %s22 = sshll.u32 %s0, 4
      %s23 = int_to_ptr.hbm [resolvable:$true] %s22
      %s24 = sshll.u32 [#allocation2], 4
      %s25 = int_to_ptr.vmem [resolvable:$true] %s24
      %27 = dma.hbm_to_vmem [thread:$0]  %s23, 128, %s25, [#allocation3]
    $region5: #{tpu_custom_call.1} parent=1 // pred_fallthru
      _
    // Predicated region
    $region6: #{tpu_custom_call.1} parent=1 // pred_check
      _
    $region7: #{tpu_custom_call.1} parent=1 // pred_check_branch
      %29 = sbr.rel (0) target = $region9
    $region8: #{tpu_custom_call.1} parent=1 // pred_region
      %31 = vsyncadd [#allocation6], 0
      %s33 = sshll.u32 %s1, 4
      %s34 = int_to_ptr.hbm [resolvable:$true] %s33
      %s35 = sshll.u32 [#allocation5], 4
      %s36 = int_to_ptr.vmem [resolvable:$true] %s35
      %38 = dma.hbm_to_vmem [thread:$0]  %s34, 128, %s36, [#allocation6]
    $region9: #{tpu_custom_call.1} parent=1 // pred_fallthru
      _
    // Predicated region
    $region10: #{tpu_custom_call.1} parent=1 // pred_check
      _
    $region11: #{tpu_custom_call.1} parent=1 // pred_check_branch
      %40 = sbr.rel (0) target = $region13
    $region12: #{tpu_custom_call.1} parent=1 // pred_region
      %42 = vsyncadd [#allocation6], 0
      %s44 = sshll.u32 %s2, 4
      %s45 = int_to_ptr.hbm [resolvable:$true] %s44
      %s46 = sshll.u32 [#allocation7], 4
      %s47 = int_to_ptr.vmem [resolvable:$true] %s46
      %49 = dma.hbm_to_vmem [thread:$0]  %s45, 128, %s47, [#allocation6]
    $region13: #{tpu_custom_call.1} parent=1 // pred_fallthru
      _
    // Predicated region
    $region14: #{tpu_custom_call.1} parent=1 // pred_check
      _
    $region15: #{tpu_custom_call.1} parent=1 // pred_check_branch
      %51 = sbr.rel (0) target = $region17
    $region16: #{tpu_custom_call.1} parent=1 // pred_region
      %53 = vsyncadd [#allocation9], 0
      %s54 = sshll.u32 %s3, 4
      %s55 = int_to_ptr.hbm [resolvable:$true] %s54
      %s56 = sshll.u32 [#allocation8], 4
      %s57 = int_to_ptr.vmem [resolvable:$true] %s56
      %62 = dma.hbm_to_vmem [thread:$0]  %s55, 512, %s57, [#allocation9], 128, 128, 8
    $region17: #{tpu_custom_call.1} parent=1 // pred_fallthru
      _
    // Predicated region
    $region18: #{tpu_custom_call.1} parent=1 // pred_check
      _
    $region19: #{tpu_custom_call.1} parent=1 // pred_check_branch
      %64 = sbr.rel (0) target = $region21
    $region20: #{tpu_custom_call.1} parent=1 // pred_region
      %66 = vsyncadd [#allocation9], 0
      %s67 = sshll.u32 %s4, 4
      %s68 = int_to_ptr.hbm [resolvable:$true] %s67
      %s69 = sshll.u32 [#allocation10], 4
      %s70 = int_to_ptr.vmem [resolvable:$true] %s69
      %75 = dma.hbm_to_vmem [thread:$0]  %s68, 512, %s70, [#allocation9], 128, 128, 8
    $region21: #{tpu_custom_call.1} parent=1 // pred_fallthru
      _
    // Predicated region
    $region22: #{tpu_custom_call.1} parent=1 // pred_check
      _
    $region23: #{tpu_custom_call.1} parent=1 // pred_check_branch
      %77 = sbr.rel (0) target = $region25
    $region24: #{tpu_custom_call.1} parent=1 // pred_region
      %79 = vsyncadd [#allocation12], 0
      %s80 = sshll.u32 %s5, 4
      %s81 = int_to_ptr.hbm [resolvable:$true] %s80
      %s82 = sshll.u32 [#allocation11], 4
      %s83 = int_to_ptr.vmem [resolvable:$true] %s82
      %88 = dma.hbm_to_vmem [thread:$0]  %s81, 512, %s83, [#allocation12], 128, 128, 8
    $region25: #{tpu_custom_call.1} parent=1 // pred_fallthru
      _
    // Predicated region
    $region26: #{tpu_custom_call.1} parent=1 // pred_check
      _
    $region27: #{tpu_custom_call.1} parent=1 // pred_check_branch
      %90 = sbr.rel (0) target = $region29
    $region28: #{tpu_custom_call.1} parent=1 // pred_region
      _
    $region29: #{tpu_custom_call.1} parent=1 // pred_fallthru
      _
    // Predicated region
    $region30: #{tpu_custom_call.1} parent=1 // pred_check
      _
    $region31: #{tpu_custom_call.1} parent=1 // pred_check_branch
      %92 = sbr.rel (0) target = $region33
    $region32: #{tpu_custom_call.1} parent=1 // pred_region
      %94 = dma.done [#allocation3], 128
    $region33: #{tpu_custom_call.1} parent=1 // pred_fallthru
      _
    // Predicated region
    $region34: #{tpu_custom_call.1} parent=1 // pred_check
      _
    $region35: #{tpu_custom_call.1} parent=1 // pred_check_branch
      %96 = sbr.rel (0) target = $region37
    $region36: #{tpu_custom_call.1} parent=1 // pred_region
      %98 = dma.done [#allocation6], 128
    $region37: #{tpu_custom_call.1} parent=1 // pred_fallthru
      _
    // Predicated region
    $region38: #{tpu_custom_call.1} parent=1 // pred_check
      _
    $region39: #{tpu_custom_call.1} parent=1 // pred_check_branch
      %100 = sbr.rel (0) target = $region41
    $region40: #{tpu_custom_call.1} parent=1 // pred_region
      %102 = dma.done [#allocation6], 128
    $region41: #{tpu_custom_call.1} parent=1 // pred_fallthru
      _
    // Predicated region
    $region42: #{tpu_custom_call.1} parent=1 // pred_check
      _
    $region43: #{tpu_custom_call.1} parent=1 // pred_check_branch
      %104 = sbr.rel (0) target = $region45
    $region44: #{tpu_custom_call.1} parent=1 // pred_region
      %106 = dma.done [#allocation9], 512
    $region45: #{tpu_custom_call.1} parent=1 // pred_fallthru
      _
    // Predicated region
    $region46: #{tpu_custom_call.1} parent=1 // pred_check
      _
    $region47: #{tpu_custom_call.1} parent=1 // pred_check_branch
      %108 = sbr.rel (0) target = $region49
    $region48: #{tpu_custom_call.1} parent=1 // pred_region
      %110 = dma.done [#allocation9], 512
    $region49: #{tpu_custom_call.1} parent=1 // pred_fallthru
      _
    // Predicated region
    $region50: #{tpu_custom_call.1} parent=1 // pred_check
      _
    $region51: #{tpu_custom_call.1} parent=1 // pred_check_branch
      %112 = sbr.rel (0) target = $region53
    $region52: #{tpu_custom_call.1} parent=1 // pred_region
      %114 = dma.done [#allocation12], 512
    $region53: #{tpu_custom_call.1} parent=1 // pred_fallthru
      _
    %v115 = vld [vmem:[#allocation2] sm:$0xff]
    %v116 = vld [vmem:[#allocation5] sm:$0xff]
    %v117 = vld [vmem:[#allocation7] sm:$0xff]
    %v118 = vld [vmem:[#allocation8] sm:$0xff]
    %v119 = vld [vmem:[#allocation8 + $0x8] sm:$0xff]
    %v120 = vld [vmem:[#allocation8 + $0x10] sm:$0xff]
    %v121 = vld [vmem:[#allocation8 + $0x18] sm:$0xff]
    %v122 = vld [vmem:[#allocation10] sm:$0xff]
    %v123 = vld [vmem:[#allocation10 + $0x8] sm:$0xff]
    %v124 = vld [vmem:[#allocation10 + $0x10] sm:$0xff]
    %v125 = vld [vmem:[#allocation10 + $0x18] sm:$0xff]
    %v126 = vld [vmem:[#allocation11] sm:$0xff]
    %v127 = vld [vmem:[#allocation11 + $0x8] sm:$0xff]
    %v128 = vld [vmem:[#allocation11 + $0x10] sm:$0xff]
    %v129 = vld [vmem:[#allocation11 + $0x18] sm:$0xff]
    %v130 = vld [vmem:[%s6] sm:$0x1]
    %v131 = vlaneseq
    %v132 = vshrl.u32 %v131, 7
    %v133 = vadd.s32 %v132, 8
    %v134 = vadd.s32 %v132, 16
    %v135 = vadd.s32 %v132, 24
    %v136 = vlaneseq
    %v137 = vand.u32 %v136, 127
    %v138 = vmul.u32 %v137, 8
    %vm139 = vcmp.ge.s32.totalorder %v132, %v138
    %vm140 = vcmp.ge.s32.totalorder %v133, %v138
    %vm141 = vcmp.ge.s32.totalorder %v134, %v138
    %vm142 = vcmp.ge.s32.totalorder %v135, %v138
    %v143 = vadd.s32 %v138, 8
    %vm144 = vcmp.lt.s32.totalorder %v132, %v143
    %vm145 = vcmp.lt.s32.totalorder %v133, %v143
    %vm146 = vcmp.lt.s32.totalorder %v134, %v143
    %vm147 = vcmp.lt.s32.totalorder %v135, %v143
    %vm148 = vmand %vm139, %vm144
    %vm149 = vmand %vm140, %vm145
    %vm150 = vmand %vm141, %vm146
    %vm151 = vmand %vm142, %vm147
    %v152 = vsel %vm148, 1, 0
    %v153 = vsel %vm149, 1, 0
    %v154 = vsel %vm150, 1, 0
    %v155 = vsel %vm151, 1, 0
    %v156 = vcvt.s32.f32 %v152
    %v157 = vcvt.s32.f32 %v153
    %v158 = vcvt.s32.f32 %v154
    %v159 = vcvt.s32.f32 %v155
    %v160 = vmul.u32 %v132, 8
    %vm161 = vcmp.ge.s32.totalorder %v137, %v160
    %v162 = vadd.s32 %v160, 8
    %vm163 = vcmp.lt.s32.totalorder %v137, %v162
    %vm164 = vmand %vm161, %vm163
    %v165 = vsel %vm164, 1, 0
    %v166 = vcvt.s32.f32 %v165
    %vm167 = vcmask 261120
    %v169 = vsel %vm167, %v115, 0
    %v172 = vsel %vm167, %v116, 0
    %174 = vmatpush.msra.mxu0 0.0
    %175 = vmatpush.msra.mxu0 0.0
    %176 = vmatpush.msra.mxu0 0.0
    %177 = vmatpush.msra.mxu0 0.0
    %178 = vmatpush.msra.mxu0 0.0
    %179 = vmatpush.msra.mxu0 0.0
    %180 = vmatpush.msra.mxu0 0.0
    %181 = vmatpush.msra.mxu0 0.0
    %182 = vmatpush.msra.mxu0 0.0
    %183 = vmatpush.msra.mxu0 0.0
    %184 = vmatpush.msra.mxu0 0.0
    %185 = vmatpush.msra.mxu0 0.0
    %186 = vmatpush.msra.mxu0 %v125
    %187 = vmatpush.msra.mxu0 %v124
    %188 = vmatpush.msra.mxu0 %v123
    %189 = vmatpush.msra.mxu0 %v122
    %190 = vmatmul.f32.gmra.mxu0 %v169
    %v191 = vpop.f32.mrf.mxu0
    %v192 = vadd.f32 0.0, %v191
    %193 = vmatmul.f32.gmra.mxu0 %v172
    %v194 = vpop.f32.mrf.mxu0
    %v195 = vadd.f32 0.0, %v194
    %196 = vdwg.mxu0
    %v198 = vsel %vm167, %v117, 0
    %200 = vmatpush.msra.mxu0 0.0
    %201 = vmatpush.msra.mxu0 0.0
    %202 = vmatpush.msra.mxu0 0.0
    %203 = vmatpush.msra.mxu0 0.0
    %204 = vmatpush.msra.mxu0 0.0
    %205 = vmatpush.msra.mxu0 0.0
    %206 = vmatpush.msra.mxu0 0.0
    %207 = vmatpush.msra.mxu0 0.0
    %208 = vmatpush.msra.mxu0 0.0
    %209 = vmatpush.msra.mxu0 0.0
    %210 = vmatpush.msra.mxu0 0.0
    %211 = vmatpush.msra.mxu0 0.0
    %212 = vmatpush.msra.mxu0 %v121
    %213 = vmatpush.msra.mxu0 %v120
    %214 = vmatpush.msra.mxu0 %v119
    %215 = vmatpush.msra.mxu0 %v118
    %216 = vmatmul.f32.gmra.mxu0 %v198
    %v217 = vpop.f32.mrf.mxu0
    %v218 = vadd.f32 0.0, %v217
    %219 = vdwg.mxu0
    %v220 = vmul.f32 %v218, %v192
    %v221 = vmul.f32 %v218, %v195
    %v223 = vsel %vm167, %v220, 0
    %v226 = vsel %vm167, %v221, 0
    %228 = vmatpush.msra.mxu0 0.0
    %229 = vmatpush.msra.mxu0 0.0
    %230 = vmatpush.msra.mxu0 0.0
    %231 = vmatpush.msra.mxu0 0.0
    %232 = vmatpush.msra.mxu0 0.0
    %233 = vmatpush.msra.mxu0 0.0
    %234 = vmatpush.msra.mxu0 0.0
    %235 = vmatpush.msra.mxu0 0.0
    %236 = vmatpush.msra.mxu0 0.0
    %237 = vmatpush.msra.mxu0 0.0
    %238 = vmatpush.msra.mxu0 0.0
    %239 = vmatpush.msra.mxu0 0.0
    %240 = vmatpush.msra.mxu0 %v159
    %241 = vmatpush.msra.mxu0 %v158
    %242 = vmatpush.msra.mxu0 %v157
    %243 = vmatpush.msra.mxu0 %v156
    %244 = vmatmul.f32.gmra.mxu0 %v223
    %v245 = vpop.f32.mrf.mxu0
    %v246 = vadd.f32 0.0, %v245
    %247 = vmatmul.f32.gmra.mxu0 %v226
    %v248 = vpop.f32.mrf.mxu0
    %v249 = vadd.f32 0.0, %v248
    %250 = vdwg.mxu0
    %v251 = vsub.f32 %v249, %v246
    %v252 = vmul.f32 %v251, 1.442695
    %v253 = vpow.pop %v252
    %v254 = vadd.f32 %v253, 1.0
    %v255 = vrcp.pop %v254
    %v256 = vmul.f32 %v254, %v255
    %v257 = vsub.f32 1.0, %v256
    %v258 = vmul.f32 %v255, %v257
    %v259 = vadd.f32 %v255, %v258
    %vm260 = vweird.f32 %v254
    %vm261 = vweird.f32 %v255
    %vm262 = vmor %vm260, %vm261
    %v263 = vsel %vm262, %v255, %v259
    %v264 = vand.u32 2147483647, %v254
    %vm265 = vcmp.eq.f32.partialorder %v264, 8.507059e+37
    %v266 = vand.u32 %v254, 2147483648
    %v267 = vor.u32 1.1754944e-38, %v266
    %v268 = vsel %vm265, %v267, %v263
    %v269 = vmul.f32 1.0, %v268
    %v270 = vsub.f32 1.0, %v269
    %vm271 = vcmask 31744
    %v273 = vsel %vm271, %v269, 0
    %v276 = vsel %vm271, %v270, 0
    %vm278 = vcmask 1043456
    %v280 = vsel %vm278, %v166, 0
    %282 = vmatpush.msra.mxu0 0.0
    %283 = vmatpush.msra.mxu0 0.0
    %284 = vmatpush.msra.mxu0 0.0
    %285 = vmatpush.msra.mxu0 0.0
    %286 = vmatpush.msra.mxu0 0.0
    %287 = vmatpush.msra.mxu0 0.0
    %288 = vmatpush.msra.mxu0 0.0
    %289 = vmatpush.msra.mxu0 0.0
    %290 = vmatpush.msra.mxu0 0.0
    %291 = vmatpush.msra.mxu0 0.0
    %292 = vmatpush.msra.mxu0 0.0
    %293 = vmatpush.msra.mxu0 0.0
    %294 = vmatpush.msra.mxu0 0.0
    %295 = vmatpush.msra.mxu0 0.0
    %296 = vmatpush.msra.mxu0 0.0
    %297 = vmatpush.msra.mxu0 %v280
    %298 = vmatmul.f32.gmra.mxu0 %v273
    %v299 = vpop.f32.mrf.mxu0
    %v300 = vadd.f32 0.0, %v299
    %301 = vmatmul.f32.gmra.mxu0 %v276
    %v302 = vpop.f32.mrf.mxu0
    %v303 = vadd.f32 0.0, %v302
    %304 = vdwg.mxu0
    %307 = vrot.lane.b32.xlu0 %v192, 96
    %v308 = vpop.permute.xlu0 %307
    %309 = vrot.lane.b32.xlu0 %v195, 96
    %v310 = vpop.permute.xlu0 %309
    %v313 = vmul.f32 %v300, %v308
    %v314 = vmul.f32 %v303, %v310
    %v315 = vadd.f32 %v313, %v314
    %v317 = vperm.slane %v130, 0
    %v320 = vsel %vm167, %v315, 0
    %322 = vmatpush.msra.mxu0 0.0
    %323 = vmatpush.msra.mxu0 0.0
    %324 = vmatpush.msra.mxu0 0.0
    %325 = vmatpush.msra.mxu0 0.0
    %326 = vmatpush.msra.mxu0 0.0
    %327 = vmatpush.msra.mxu0 0.0
    %328 = vmatpush.msra.mxu0 0.0
    %329 = vmatpush.msra.mxu0 0.0
    %330 = vmatpush.msra.mxu0 0.0
    %331 = vmatpush.msra.mxu0 0.0
    %332 = vmatpush.msra.mxu0 0.0
    %333 = vmatpush.msra.mxu0 0.0
    %334 = vmatpush.msra.mxu0 %v129
    %335 = vmatpush.msra.mxu0 %v128
    %336 = vmatpush.msra.mxu0 %v127
    %337 = vmatpush.msra.mxu0 %v126
    %338 = vmatmul.f32.gmra.mxu0 %v320
    %v339 = vpop.f32.mrf.mxu0
    %v340 = vadd.f32 %v317, %v339
    %341 = vdwg.mxu0
    %342 = vst.msk [vmem:[#allocation13] sm:$0xff] %vm167, %v340
    // Predicated region
    $region54: #{tpu_custom_call.1} parent=1 // pred_check
      _
    $region55: #{tpu_custom_call.1} parent=1 // pred_check_branch
      %344 = sbr.rel (0) target = $region57
    $region56: #{tpu_custom_call.1} parent=1 // pred_region
      %346 = vsyncadd [#allocation4], 0
      %s348 = sshll.u32 [#allocation13], 4
      %s349 = int_to_ptr.vmem [resolvable:$true] %s348
      %s350 = sshll.u32 %s7, 4
      %s351 = int_to_ptr.hbm [resolvable:$true] %s350
      %353 = dma.vmem_to_hbm [thread:$0]  %s349, 128, %s351, [#allocation4]
    $region57: #{tpu_custom_call.1} parent=1 // pred_fallthru
      _
    // Predicated region
    $region58: #{tpu_custom_call.1} parent=1 // pred_check
      _
    $region59: #{tpu_custom_call.1} parent=1 // pred_check_branch
      %355 = sbr.rel (0) target = $region61
    $region60: #{tpu_custom_call.1} parent=1 // pred_region
      %357 = dma.done [#allocation4], 128
    $region61: #{tpu_custom_call.1} parent=1 // pred_fallthru
      _
    %358 = vsyncpa [#allocation3], 1
    %359 = vsyncpa [#allocation6], 1
    %360 = vsyncpa [#allocation9], 1
    %361 = vsyncpa [#allocation12], 1
    %362 = vsyncpa [#allocation4], 1

</llo_original>
